<compile_context>
chip_gen: v5e
topology: v5e:2x2
jax: 0.10.0
libtpu: 0.0.40
codegen_flags: <defaults>
</compile_context>

<pallas_src>
import functools
import math

import jax
import jax.numpy as jnp
from jax import lax  # noqa: F401  (kept for parity with reference patterns)
from jax.experimental import pallas as pl
from jax.experimental.pallas import tpu as pltpu

N_EMBED = 64          # matches `n_embed` in the PyTorch module
CONTEXT_LEN = 256     # tril buffer size (only the [:T, :T] slice is ever used)


def _attn_body(xq_ref, xkv_ref, w_ref, bias_ref, o_ref, *, out_hq):
    """Shared attention body.

    xq_ref:   (Bb, Tq, C) f32  query rows for this q-tile
    xkv_ref:  (Bb, T,  C) f32  full sequence for k/v (may be the same ref)
    w_ref:    (C, 3H)    bf16  [q (pre-scaled 1/sqrt(C)) | k | v], pre-transposed
    bias_ref: (Tq, T)    f32   additive causal mask (0 / -1e30)
    o_ref:    (Bb, H, Tq) if out_hq else (Bb, Tq, H), f32
    """
    Bb, Tq, C = xq_ref.shape
    T = xkv_ref.shape[1]
    H = w_ref.shape[1] // 3

    xq2 = xq_ref[...].reshape(Bb * Tq, C).astype(jnp.bfloat16)
    if xkv_ref is xq_ref:
        xkv2 = xq2                      # shared block: load/cast once
    else:
        xkv2 = xkv_ref[...].reshape(Bb * T, C).astype(jnp.bfloat16)

    w = w_ref[...]                      # (C, 3H) bf16; slice the tiny weight,
    q = jnp.dot(xq2, w[:, 0 * H:1 * H],  # never lane-slice the big activation
                preferred_element_type=jnp.float32)
    k = jnp.dot(xkv2, w[:, 1 * H:2 * H], preferred_element_type=jnp.float32)
    v = jnp.dot(xkv2, w[:, 2 * H:3 * H], preferred_element_type=jnp.float32)
    q = q.reshape(Bb, Tq, H).astype(jnp.bfloat16)
    k = k.reshape(Bb, T, H).astype(jnp.bfloat16)
    v = v.reshape(Bb, T, H).astype(jnp.bfloat16)

    # Attention scores (Bb, Tq, T): bf16 operands, f32 accumulation, then a
    # single add of the precomputed causal bias.
    scores = jnp.einsum('bqh,bkh->bqk', q, k,
                        preferred_element_type=jnp.float32)
    scores = scores + bias_ref[...]

    # Numerically stable softmax with DEFERRED normalization (the reciprocal
    # multiply happens on the much smaller output tensor below).
    # TODO(synk): element-wise math kept f32 for v5e; bf16 would help v6e/v7x.
    m = jnp.max(scores, axis=-1, keepdims=True)
    e = jnp.exp(scores - m)
    e16 = e.astype(jnp.bfloat16)

    # TODO(synk): flash-style kv-chunked loop skipping fully-masked causal
    # tiles would halve score/softmax work for long T (T <= 256 here).
    # TODO(synk): nn.Dropout(p=0.2) on the attention weights is identity in
    # eval mode; training-mode dropout (pltpu.prng_*) intentionally omitted.

    if out_hq:
        # Lane-dense store: (Bb, H, Tq), last dim Tq (>= 128 in this path).
        denom = jnp.sum(e, axis=-1)                            # (Bb, Tq)
        inv = pl.reciprocal(denom, approx=True)[:, None, :]    # (Bb, 1, Tq)
        vT = jnp.swapaxes(v, 1, 2)                             # (Bb, H, T), tiny XLU
        out = jnp.einsum('bhk,bqk->bhq', vT, e16,
                         preferred_element_type=jnp.float32)   # (Bb, H, Tq)
        o_ref[...] = (out * inv).astype(o_ref.dtype)
    else:
        denom = jnp.sum(e, axis=-1, keepdims=True)             # (Bb, Tq, 1)
        inv = pl.reciprocal(denom, approx=True)
        out = jnp.einsum('bqk,bkh->bqh', e16, v,
                         preferred_element_type=jnp.float32)   # (Bb, Tq, H)
        o_ref[...] = (out * inv).astype(o_ref.dtype)


def _kernel_shared_x(x_ref, w_ref, bias_ref, o_ref, *, out_hq):
    # Single q-tile: the same x block serves q and k/v (x DMA'd only once).
    _attn_body(x_ref, x_ref, w_ref, bias_ref, o_ref, out_hq=out_hq)


def _kernel_split_x(xq_ref, xkv_ref, w_ref, bias_ref, o_ref, *, out_hq):
    _attn_body(xq_ref, xkv_ref, w_ref, bias_ref, o_ref, out_hq=out_hq)


def _pick_block_b(B, T, Tq, C, H, nq,
                  vmem_budget=12 * 1024 * 1024, max_bb=32):
    """Largest divisor of B whose per-step VMEM footprint fits a budget safe
    on every generation (v5e 16 MiB scoped default, v7x 32 MiB default),
    capped at max_bb, preferring >= 2 total grid steps (both v7x cores)."""
    per_b = (2 * Tq * C * 4        # x_q double buffers
             + 2 * T * C * 4       # x_kv double buffers
             + 2 * Tq * H * 4      # output double buffers
             + 2 * Tq * T * 4      # scores + exp temporaries
             + 3 * T * H * 4)      # q/k/v temporaries (over-estimate)
    fixed = 2 * Tq * T * 4 + 4 * C * 3 * H * 2
    cap = int(max(1, min(max_bb, (vmem_budget - fixed) // per_b)))
    divisors = [d for d in range(1, B + 1) if B % d == 0 and d <= cap]
    preferred = [d for d in divisors if (B // d) * nq >= 2]
    return max(preferred) if preferred else max(divisors)


def head_forward(x, wk, wq, wv):
    """x: (B, T, C) float32;  wk/wq/wv: (H, C) float32  ->  (B, T, H) float32."""
    B, T, C = x.shape
    H = wk.shape[0]
    assert C == N_EMBED and T <= CONTEXT_LEN

    # One-time, XLA-amortized prep (outside the kernel / grid loop):
    #  - fold 1/sqrt(C) into Wq, fuse q/k/v into one pre-transposed (C, 3H)
    #    bf16 matrix (native MXU rate; f32 accumulation in-kernel),
    #  - precompute the additive causal mask (finite -1e30, never NaN).
    w_fused = jnp.concatenate(
        [wq * (1.0 / math.sqrt(C)), wk, wv], axis=0).T.astype(jnp.bfloat16)
    bias = jnp.where(jnp.tril(jnp.ones((T, T), dtype=bool)),
                     0.0, -1e30).astype(jnp.float32)

    # Query-tile axis keeps both v7x TensorCores busy for small B and bounds
    # the live (Tq, T) score tile.
    Tq = 128 if (T > 128 and T % 128 == 0) else T
    nq = T // Tq

    Bb = _pick_block_b(B, T, Tq, C, H, nq)
    grid = (B // Bb, nq)

    out_hq = T >= 128       # lane-dense (B, H, T) layout only when T is wide
    kernel = functools.partial(
        _kernel_shared_x if nq == 1 else _kernel_split_x, out_hq=out_hq)

    w_spec = pl.BlockSpec((C, 3 * H), lambda b, qi: (0, 0))
    bias_spec = pl.BlockSpec((Tq, T), lambda b, qi: (qi, 0))
    xkv_spec = pl.BlockSpec((Bb, T, C), lambda b, qi: (b, 0, 0))
    if nq == 1:
        in_specs = [xkv_spec, w_spec, bias_spec]
        args = (x, w_fused, bias)
    else:
        xq_spec = pl.BlockSpec((Bb, Tq, C), lambda b, qi: (b, qi, 0))
        in_specs = [xq_spec, xkv_spec, w_spec, bias_spec]
        args = (x, x, w_fused, bias)

    if out_hq:
        out_shape = jax.ShapeDtypeStruct((B, H, T), x.dtype)
        out_spec = pl.BlockSpec((Bb, H, Tq), lambda b, qi: (b, 0, qi))
    else:
        out_shape = jax.ShapeDtypeStruct((B, T, H), x.dtype)
        out_spec = pl.BlockSpec((Bb, Tq, H), lambda b, qi: (b, qi, 0))

    out = pl.pallas_call(
        kernel,
        out_shape=out_shape,
        grid_spec=pltpu.PrefetchScalarGridSpec(
            num_scalar_prefetch=0,
            grid=grid,
            in_specs=in_specs,
            out_specs=out_spec),
        compiler_params=pltpu.CompilerParams(
            dimension_semantics=("parallel", "parallel")),
    )(*args)

    if out_hq:
        # Layout plumbing only: undo the lane-dense (B, H, T) kernel layout.
        out = jnp.transpose(out, (0, 2, 1))
    return out


def _reference(x, wk, wq, wv):
    """Pure-JAX f32 reference mirroring the PyTorch forward (eval mode)."""
    B, T, C = x.shape
    k = x @ wk.T
    q = x @ wq.T
    v = x @ wv.T
    w = (q @ jnp.swapaxes(k, -1, -2)) / math.sqrt(C)
    mask = jnp.tril(jnp.ones((T, T), dtype=bool))
    w = jnp.where(mask, w, -jnp.inf)
    w = jax.nn.softmax(w, axis=-1)
    return w @ v


if __name__ == "__main__":
    key = jax.random.PRNGKey(0)
    head_size = 16
    bound = 1.0 / math.sqrt(N_EMBED)

    kk, kq, kv, kx1, kx2 = jax.random.split(key, 5)
    # Deterministic nn.Linear-style init: U(-1/sqrt(in), 1/sqrt(in)), no bias.
    wk = jax.random.uniform(kk, (head_size, N_EMBED), jnp.float32, -bound, bound)
    wq = jax.random.uniform(kq, (head_size, N_EMBED), jnp.float32, -bound, bound)
    wv = jax.random.uniform(kv, (head_size, N_EMBED), jnp.float32, -bound, bound)

    # Small shape (exercises the shared-x, direct (B,T,H) store path).
    B, T = 2, 8
    x = jax.random.normal(kx1, (B, T, N_EMBED), dtype=jnp.float32)
    out = jax.block_until_ready(head_forward(x, wk, wq, wv))
    ref = _reference(x, wk, wq, wv)
    assert out.shape == (B, T, head_size)
    # bf16 MXU operands + approx reciprocal -> loosened tolerance vs f32 ref.
    assert jnp.allclose(out, ref, atol=2e-2, rtol=2e-2), "mismatch (T=8)"

    # Full context length (exercises q-tiling + lane-dense transposed output).
    T2 = CONTEXT_LEN
    x2 = jax.random.normal(kx2, (B, T2, N_EMBED), dtype=jnp.float32)
    out2 = jax.block_until_ready(head_forward(x2, wk, wq, wv))
    ref2 = _reference(x2, wk, wq, wv)
    assert out2.shape == (B, T2, head_size)
    assert jnp.allclose(out2, ref2, atol=2e-2, rtol=2e-2), "mismatch (T=256)"

    print("KERNEL_OK")
</pallas_src>

<mosaic_0001>
module attributes {stable_mosaic.version = 11 : i64} {
  func.func @_kernel_shared_x(%arg0: i32, %arg1: i32, %arg2: memref<1x8x64xf32, #tpu.memory_space<vmem>>, %arg3: memref<64x48xbf16, #tpu.memory_space<vmem>>, %arg4: memref<8x8xf32, #tpu.memory_space<vmem>>, %arg5: memref<1x8x16xf32, #tpu.memory_space<vmem>>) attributes {dimension_semantics = [#tpu.dimension_semantics<parallel>, #tpu.dimension_semantics<parallel>], iteration_bounds = array<i64: 2, 1>, scalar_prefetch = 0 : i64, scratch_operands = 0 : i64, tpu.core_type = #tpu.core_type<tc>, window_params = [{transform_indices = @transform_0, window_bounds = array<i64: 1, 8, 64>}, {pipeline_mode = #tpu.pipeline_mode<synchronous>, transform_indices = @transform_1, window_bounds = array<i64: 64, 48>}, {transform_indices = @transform_2, window_bounds = array<i64: 8, 8>}, {transform_indices = @transform_3, window_bounds = array<i64: 1, 8, 16>}]} {
    %c0 = arith.constant 0 : index
    %c0_0 = arith.constant 0 : index
    %c0_1 = arith.constant 0 : index
    %0 = vector.load %arg2[%c0, %c0_0, %c0_1] : memref<1x8x64xf32, #tpu.memory_space<vmem>>, vector<1x8x64xf32>
    %1 = vector.shape_cast %0 : vector<1x8x64xf32> to vector<8x64xf32>
    %2 = arith.truncf %1 : vector<8x64xf32> to vector<8x64xbf16>
    %c0_2 = arith.constant 0 : index
    %c0_3 = arith.constant 0 : index
    %3 = vector.load %arg3[%c0_2, %c0_3] : memref<64x48xbf16, #tpu.memory_space<vmem>>, vector<64x48xbf16>
    %4 = vector.extract_strided_slice %3 {offsets = [0, 0], sizes = [64, 16], strides = [1, 1]} : vector<64x48xbf16> to vector<64x16xbf16>
    %cst = arith.constant dense<0.000000e+00> : vector<8x16xf32>
    %5 = tpu.matmul %2, %4, %cst {dimension_numbers = #tpu.dot_dimension_numbers<[1], [0], [0], [1], [0, 0, 1, 1], [], []>} : vector<8x64xbf16>, vector<64x16xbf16>, vector<8x16xf32> -> vector<8x16xf32>
    %6 = vector.extract_strided_slice %3 {offsets = [0, 16], sizes = [64, 16], strides = [1, 1]} : vector<64x48xbf16> to vector<64x16xbf16>
    %cst_4 = arith.constant dense<0.000000e+00> : vector<8x16xf32>
    %7 = tpu.matmul %2, %6, %cst_4 {dimension_numbers = #tpu.dot_dimension_numbers<[1], [0], [0], [1], [0, 0, 1, 1], [], []>} : vector<8x64xbf16>, vector<64x16xbf16>, vector<8x16xf32> -> vector<8x16xf32>
    %8 = vector.extract_strided_slice %3 {offsets = [0, 32], sizes = [64, 16], strides = [1, 1]} : vector<64x48xbf16> to vector<64x16xbf16>
    %cst_5 = arith.constant dense<0.000000e+00> : vector<8x16xf32>
    %9 = tpu.matmul %2, %8, %cst_5 {dimension_numbers = #tpu.dot_dimension_numbers<[1], [0], [0], [1], [0, 0, 1, 1], [], []>} : vector<8x64xbf16>, vector<64x16xbf16>, vector<8x16xf32> -> vector<8x16xf32>
    %10 = vector.shape_cast %5 : vector<8x16xf32> to vector<1x8x16xf32>
    %11 = arith.truncf %10 : vector<1x8x16xf32> to vector<1x8x16xbf16>
    %12 = vector.shape_cast %7 : vector<8x16xf32> to vector<1x8x16xf32>
    %13 = arith.truncf %12 : vector<1x8x16xf32> to vector<1x8x16xbf16>
    %14 = vector.shape_cast %9 : vector<8x16xf32> to vector<1x8x16xf32>
    %15 = arith.truncf %14 : vector<1x8x16xf32> to vector<1x8x16xbf16>
    "tpu.trace_start"() <{level = 10 : i32, message = "bqh,bkh->bqk"}> : () -> ()
    %cst_6 = arith.constant dense<0.000000e+00> : vector<1x8x8xf32>
    %16 = tpu.matmul %11, %13, %cst_6 {dimension_numbers = #tpu.dot_dimension_numbers<[2], [2], [1], [1], [0, 0, 0, 1, 1, 1], [0], [0]>} : vector<1x8x16xbf16>, vector<1x8x16xbf16>, vector<1x8x8xf32> -> vector<1x8x8xf32>
    "tpu.trace_stop"() : () -> ()
    %c0_7 = arith.constant 0 : index
    %c0_8 = arith.constant 0 : index
    %17 = vector.load %arg4[%c0_7, %c0_8] : memref<8x8xf32, #tpu.memory_space<vmem>>, vector<8x8xf32>
    %18 = vector.shape_cast %17 : vector<8x8xf32> to vector<1x8x8xf32>
    %19 = arith.addf %16, %18 : vector<1x8x8xf32>
    %cst_9 = arith.constant dense<0xFF800000> : vector<1x8xf32>
    %20 = vector.multi_reduction <maximumf>, %19, %cst_9 [2] : vector<1x8x8xf32> to vector<1x8xf32>
    %21 = vector.shape_cast %20 : vector<1x8xf32> to vector<1x8x1xf32>
    %22 = vector.broadcast %21 : vector<1x8x1xf32> to vector<1x8x8xf32>
    %23 = arith.subf %19, %22 : vector<1x8x8xf32>
    %24 = math.exp %23 : vector<1x8x8xf32>
    %25 = arith.truncf %24 : vector<1x8x8xf32> to vector<1x8x8xbf16>
    %cst_10 = arith.constant dense<0.000000e+00> : vector<1x8xf32>
    %26 = vector.multi_reduction <add>, %24, %cst_10 [2] : vector<1x8x8xf32> to vector<1x8xf32>
    %27 = vector.shape_cast %26 : vector<1x8xf32> to vector<1x8x1xf32>
    %28 = tpu.reciprocal %27 {approx = true} : vector<1x8x1xf32> -> vector<1x8x1xf32>
    "tpu.trace_start"() <{level = 10 : i32, message = "bqk,bkh->bqh"}> : () -> ()
    %cst_11 = arith.constant dense<0.000000e+00> : vector<1x8x16xf32>
    %29 = tpu.matmul %25, %15, %cst_11 {dimension_numbers = #tpu.dot_dimension_numbers<[2], [1], [1], [2], [0, 0, 0, 1, 1, 2], [0], [0]>} : vector<1x8x8xbf16>, vector<1x8x16xbf16>, vector<1x8x16xf32> -> vector<1x8x16xf32>
    "tpu.trace_stop"() : () -> ()
    %30 = vector.broadcast %28 : vector<1x8x1xf32> to vector<1x8x16xf32>
    %31 = arith.mulf %29, %30 : vector<1x8x16xf32>
    %c0_12 = arith.constant 0 : index
    %c0_13 = arith.constant 0 : index
    %c0_14 = arith.constant 0 : index
    %32 = vector.load %arg5[%c0_12, %c0_13, %c0_14] : memref<1x8x16xf32, #tpu.memory_space<vmem>>, vector<1x8x16xf32>
    tpu.vector_store %arg5[%c0_12, %c0_13, %c0_14], %31 {strides = array<i32>} : memref<1x8x16xf32, #tpu.memory_space<vmem>>, vector<1x8x16xf32>,
    return
  }
  func.func @transform_0(%arg0: i32, %arg1: i32) -> (i32, i32, i32) {
    %c0_i32 = arith.constant 0 : i32
    %c0_i32_0 = arith.constant 0 : i32
    %c0_i32_1 = arith.constant 0 : i32
    return %arg0, %c0_i32, %c0_i32_0 : i32, i32, i32
  }
  func.func @transform_1(%arg0: i32, %arg1: i32) -> (i32, i32) {
    %c0_i32 = arith.constant 0 : i32
    %c0_i32_0 = arith.constant 0 : i32
    %c0_i32_1 = arith.constant 0 : i32
    return %c0_i32, %c0_i32_0 : i32, i32
  }
  func.func @transform_2(%arg0: i32, %arg1: i32) -> (i32, i32) {
    %c0_i32 = arith.constant 0 : i32
    %c0_i32_0 = arith.constant 0 : i32
    return %arg1, %c0_i32 : i32, i32
  }
  func.func @transform_3(%arg0: i32, %arg1: i32) -> (i32, i32, i32) {
    %c0_i32 = arith.constant 0 : i32
    %c0_i32_0 = arith.constant 0 : i32
    return %arg0, %arg1, %c0_i32 : i32, i32, i32
  }
}

</mosaic_0001>

<llo_original>
// kernel: tpu_custom_call.1
$region0: #{tpu_custom_call.1}
  #allocation0 [shape = 'u32[]', space=smem, size = 0x4, offset = 0x4, fixed_abs, tag = 'smem constant byte address 0x4 - core index']
  #allocation1 [shape = 'u32[72,128]{1,0:T(1,128)}', space=vmem, size = 0x9000, scoped, tag = 'internal scratch']
  %s0 = inlined_call_operand.vmem [shape: f32[2,8,64], index: 0, kind: input, shape index: {}]
  %s1 = inlined_call_operand.vmem [shape: bf16[64,48], index: 1, kind: input, shape index: {}]
  %s2 = inlined_call_operand.vmem [shape: f32[8,8], index: 2, kind: input, shape index: {}]
  %s3 = inlined_call_operand.hbm [shape: f32[2,8,16], index: 3, kind: output, shape index: {}]
  %s4 = sld [smem:[#allocation0]]
  $region45: #{tpu_custom_call.1} parent=0
    _
  %s6 = ssub.s32 1, %s4
  %s7 = scalar_select 0, %s6, %s4
  $region1: #{tpu_custom_call.1} parent=0
    #allocation2 [shape = 'u8[8192]{0}', space=vmem, size = 0x2000, scoped, tag = 'output window, operand 0']
    #allocation3 [shape = 's32[2]{0}', space=sflag, size = 0x8, scoped, tag = 'scoped memory for tpu_custom_call.1']
    %8 = vsyncpa [#allocation3], 0
    %s9 = scalar_lea.sflag [#allocation3], 1
    %10 = vsyncpa %s9, 0
    loop: start=0, step=1, limit=4
    $region2: #{tpu_custom_call.1} parent=1 // loop_pre_header
      _
    $region3: #{tpu_custom_call.1} parent=1 // loop_header
      %s12 = sphi 0, %s16
      %p13 = scmp.ge.s32.totalorder %s12, 4
      %s19 = sphi 0, %s31
      %s20 = sphi 0, %s27
      %s21 = sphi 0, %s19
      %s22 = sphi 0, %s20
      %s23 = sphi 0, %s21
      %s24 = sphi 0, %s22
      %s34 = sphi 0, %s36
      %s37 = sphi 0, %s34
      %s38 = sphi 0, %s37
      %s54 = sphi 0, %s38
      %s58 = sphi 0, %s58
      %s60 = sphi 0, %s58
      %s61 = sphi 0, %s60
      %s75 = sphi 0, %s61
      %s81 = sphi 0, %s83
      %s84 = sphi 0, %s81
      %s85 = sphi 0, %s84
      %s101 = sphi 0, %s85
      %s109 = sphi 0, %s111
      %s112 = sphi 0, %s109
      %s113 = sphi 0, %s112
      %s129 = sphi 0, %s113
    $region4: #{tpu_custom_call.1} parent=1 // loop_header_branch
      %15 = sbr.rel (%p13) target = $region8
    $region5: #{tpu_custom_call.1} parent=1 // loop_body
      %s17 = ssub.s32 %s12, 1
      %s18 = ssub.s32 %s12, 2
      %s25 = sadd.s32 1, %s20
      %p26 = scmp.ge.s32.totalorder %s25, 1
      %s27 = scalar_select %p26, 0, %s25
      %s28 = sadd.s32 1, %s19
      %s29 = scalar_select %p26, %s28, %s19
      %p30 = scmp.ge.s32.totalorder %s29, 2
      %s31 = scalar_select %p30, 0, %s29
      %s32 = ssub.s32 %s19, %s31
      %p33 = scmp.eq.s32.totalorder %s32, 0
      %s35 = sadd.s32 %s34, 1
      %s36 = scalar_select %p33, %s34, %s35
      %p39 = pneg %p33
      %p40 = scmp.eq.s32.totalorder %s12, 1
      %p41 = por %p39, %p40
      %p42 = scmp.ne.s32.totalorder %s34, %s37
      %p43 = scmp.eq.s32.totalorder %s12, 0
      %p44 = por %p42, %p43
      %p45 = scmp.ne.s32.totalorder %s34, %s37
      %p46 = scmp.eq.s32.totalorder %s17, 1
      %p47 = por %p45, %p46
      %p48 = scmp.ne.s32.totalorder %s37, %s38
      %p49 = scmp.eq.s32.totalorder %s17, 0
      %p50 = por %p48, %p49
      %p51 = scmp.ne.s32.totalorder %s37, %s38
      %p52 = scmp.eq.s32.totalorder %s18, 1
      %p53 = por %p51, %p52
      %p55 = scmp.ne.s32.totalorder %s38, %s54
      %p56 = scmp.eq.s32.totalorder %s18, 0
      %p57 = por %p55, %p56
      %s59 = sadd.s32 %s58, 1
      %p62 = scmp.eq.s32.totalorder %s12, 1
      %p63 = scmp.ne.s32.totalorder %s58, %s60
      %p64 = scmp.eq.s32.totalorder %s12, 0
      %p65 = por %p63, %p64
      %p66 = scmp.ne.s32.totalorder %s58, %s60
      %p67 = scmp.eq.s32.totalorder %s17, 1
      %p68 = por %p66, %p67
      %p69 = scmp.ne.s32.totalorder %s60, %s61
      %p70 = scmp.eq.s32.totalorder %s17, 0
      %p71 = por %p69, %p70
      %p72 = scmp.ne.s32.totalorder %s60, %s61
      %p73 = scmp.eq.s32.totalorder %s18, 1
      %p74 = por %p72, %p73
      %p76 = scmp.ne.s32.totalorder %s61, %s75
      %p77 = scmp.eq.s32.totalorder %s18, 0
      %p78 = por %p76, %p77
      %s79 = ssub.s32 %s20, %s27
      %p80 = scmp.eq.s32.totalorder %s79, 0
      %s82 = sadd.s32 %s81, 1
      %s83 = scalar_select %p80, %s81, %s82
      %p86 = pneg %p80
      %p87 = scmp.eq.s32.totalorder %s12, 1
      %p88 = por %p86, %p87
      %p89 = scmp.ne.s32.totalorder %s81, %s84
      %p90 = scmp.eq.s32.totalorder %s12, 0
      %p91 = por %p89, %p90
      %p92 = scmp.ne.s32.totalorder %s81, %s84
      %p93 = scmp.eq.s32.totalorder %s17, 1
      %p94 = por %p92, %p93
      %p95 = scmp.ne.s32.totalorder %s84, %s85
      %p96 = scmp.eq.s32.totalorder %s17, 0
      %p97 = por %p95, %p96
      %p98 = scmp.ne.s32.totalorder %s84, %s85
      %p99 = scmp.eq.s32.totalorder %s18, 1
      %p100 = por %p98, %p99
      %p102 = scmp.ne.s32.totalorder %s85, %s101
      %p103 = scmp.eq.s32.totalorder %s18, 0
      %p104 = por %p102, %p103
      %s105 = ssub.s32 %s19, %s31
      %s106 = ssub.s32 %s20, %s27
      %s107 = sor.u32 %s105, %s106
      %p108 = scmp.eq.s32.totalorder %s107, 0
      %s110 = sadd.s32 %s109, 1
      %s111 = scalar_select %p108, %s109, %s110
      %p114 = pneg %p108
      %p115 = scmp.eq.s32.totalorder %s12, 1
      %p116 = por %p114, %p115
      %p117 = scmp.ne.s32.totalorder %s109, %s112
      %p118 = scmp.eq.s32.totalorder %s12, 0
      %p119 = por %p117, %p118
      %p120 = scmp.ne.s32.totalorder %s109, %s112
      %p121 = scmp.eq.s32.totalorder %s17, 1
      %p122 = por %p120, %p121
      %p123 = scmp.ne.s32.totalorder %s112, %s113
      %p124 = scmp.eq.s32.totalorder %s17, 0
      %p125 = por %p123, %p124
      %p126 = scmp.ne.s32.totalorder %s112, %s113
      %p127 = scmp.eq.s32.totalorder %s18, 1
      %p128 = por %p126, %p127
      %p130 = scmp.ne.s32.totalorder %s113, %s129
      %p131 = scmp.eq.s32.totalorder %s18, 0
      %p132 = por %p130, %p131
      %p133 = scmp.le.s32.totalorder 1, %s12
      %p134 = scmp.lt.s32.totalorder %s12, 3
      %p135 = pnand %p133, %p134
      %p136 = pneg %p135
      // Predicated region
      $region9: #{tpu_custom_call.1} parent=5 // pred_check
        _
      $region10: #{tpu_custom_call.1} parent=5 // pred_check_branch
        %138 = sbr.rel (%p135) target = $region12
      $region11: #{tpu_custom_call.1} parent=5 // pred_region
        %s139 = ssub.s32 %s12, 1
        // Predicated region
        $region13: #{tpu_custom_call.1} parent=11 // pred_check
          %p140 = pneg %p71
        $region14: #{tpu_custom_call.1} parent=11 // pred_check_branch
          %142 = sbr.rel (%p140) target = $region16
        $region15: #{tpu_custom_call.1} parent=11 // pred_region
          _
        $region16: #{tpu_custom_call.1} parent=11 // pred_fallthru
          _
        // Predicated region
        $region17: #{tpu_custom_call.1} parent=11 // pred_check
          %p143 = pneg %p97
        $region18: #{tpu_custom_call.1} parent=11 // pred_check_branch
          %145 = sbr.rel (%p143) target = $region20
        $region19: #{tpu_custom_call.1} parent=11 // pred_region
          %p146 = scmp.lt.s32.totalorder %s22, 0
          %s147 = scalar_select %p146, %s22, 0
          %s148 = smul.addr %s147, 8
          %s149 = scalar_lea.vmem %s2, %s148
        $region20: #{tpu_custom_call.1} parent=11 // pred_fallthru
          _
      $region12: #{tpu_custom_call.1} parent=5 // pred_fallthru
        _
      %p150 = scmp.lt.s32.totalorder %s12, 2
      // Predicated region
      $region21: #{tpu_custom_call.1} parent=5 // pred_check
        %p151 = pneg %p150
      $region22: #{tpu_custom_call.1} parent=5 // pred_check_branch
        %153 = sbr.rel (%p151) target = $region24
      $region23: #{tpu_custom_call.1} parent=5 // pred_region
        // Predicated region
        $region25: #{tpu_custom_call.1} parent=23 // pred_check
          %p154 = pneg %p44
        $region26: #{tpu_custom_call.1} parent=23 // pred_check_branch
          %156 = sbr.rel (%p154) target = $region28
        $region27: #{tpu_custom_call.1} parent=23 // pred_region
          %p157 = scmp.lt.s32.totalorder %s19, 1
          %s158 = scalar_select %p157, %s19, 1
          %s159 = smul.addr %s158, 8
          %s160 = scalar_lea.vmem %s0, %s159
        $region28: #{tpu_custom_call.1} parent=23 // pred_fallthru
          _
      $region24: #{tpu_custom_call.1} parent=5 // pred_fallthru
        _
      %p161 = scmp.le.s32.totalorder 1, %s12
      %p162 = scmp.lt.s32.totalorder %s12, 3
      %p163 = pnand %p161, %p162
      %p164 = pneg %p163
      // Predicated region
      $region29: #{tpu_custom_call.1} parent=5 // pred_check
        _
      $region30: #{tpu_custom_call.1} parent=5 // pred_check_branch
        %166 = sbr.rel (%p163) target = $region32
      $region31: #{tpu_custom_call.1} parent=5 // pred_region
        %s167 = ssub.s32 %s12, 1
        %p168 = scmp.lt.s32.totalorder %s21, 1
        %s169 = scalar_select %p168, %s21, 1
        %s170 = smul.addr %s169, 8
        %s171 = scalar_lea.vmem %s0, %s170
        %p172 = pneg %p50
        %p173 = pneg %p47
        %p174 = pneg %p71
        %p175 = pneg %p68
        %p176 = scmp.lt.s32.totalorder %s22, 0
        %s177 = scalar_select %p176, %s22, 0
        %s178 = smul.addr %s177, 8
        %s179 = scalar_lea.vmem %s2, %s178
        %p180 = pneg %p97
        %p181 = pneg %p94
        %p182 = pneg %p125
        %p183 = pneg %p122
        %s184 = sand.u32 %s112, 1
        %s185 = scalar_lea.sflag [#allocation3], %s184
        %s186 = sand.u32 %s112, 1
        %s187 = smul.addr %s186, 8
        %s188 = scalar_lea.vmem [#allocation2], %s187
        %p189 = scmp.lt.s32.totalorder %s21, 1
        %s190 = scalar_select %p189, %s21, 1
        %s191 = smul.addr %s190, 8
        %s192 = scalar_lea.vmem %s0, %s191
        %p193 = scmp.lt.s32.totalorder %s22, 0
        %s194 = scalar_select %p193, %s22, 0
        %s195 = smul.addr %s194, 8
        %s196 = scalar_lea.vmem %s2, %s195
        %v198 = vld [vmem:[%s192] sm:$0xff]
        %v199 = vpack.c.bf16 %v198, %v198
        %v200 = vld [vmem:[%s1] sm:$0xf]
        %v201 = vld [vmem:[%s1 + $0x4] sm:$0xf]
        %v202 = vld [vmem:[%s1 + $0x8] sm:$0xf]
        %v203 = vld [vmem:[%s1 + $0xc] sm:$0xf]
        %v204 = vld [vmem:[%s1 + $0x10] sm:$0xf]
        %v205 = vld [vmem:[%s1 + $0x14] sm:$0xf]
        %v206 = vld [vmem:[%s1 + $0x18] sm:$0xf]
        %v207 = vld [vmem:[%s1 + $0x1c] sm:$0xf]
        %v216 = vunpack.c.l.b16 %v200
        %v217 = vunpack.c.l.b16 %v201
        %v218 = vunpack.c.l.b16 %v202
        %v219 = vunpack.c.l.b16 %v203
        %v220 = vunpack.c.l.b16 %v204
        %v221 = vunpack.c.l.b16 %v205
        %v222 = vunpack.c.l.b16 %v206
        %v223 = vunpack.c.l.b16 %v207
        %v224 = vpack.c.b16 %v217, %v216
        %v225 = vpack.c.b16 %v219, %v218
        %v226 = vpack.c.b16 %v221, %v220
        %v227 = vpack.c.b16 %v223, %v222
        %vm232 = vcmask 523264
        %v234 = vsel %vm232, %v199, 0
        %236 = vmatpush.bf16.msra.mxu0 0
        %237 = vmatpush.bf16.msra.mxu0 0
        %238 = vmatpush.bf16.msra.mxu0 0
        %239 = vmatpush.bf16.msra.mxu0 0
        %240 = vmatpush.bf16.msra.mxu0 %v227
        %241 = vmatpush.bf16.msra.mxu0 %v226
        %242 = vmatpush.bf16.msra.mxu0 %v225
        %243 = vmatpush.bf16.msra.mxu0 %v224
        %244 = vmatmul.bf16.gmra.mxu0 %v234
        %v245 = vpop.f32.mrf.mxu0
        %v246 = vadd.f32 0.0, %v245
        %v247 = vpop.f32.mrf.mxu0
        %248 = vdwg.mxu0
        %249 = vrot.lane.b32.xlu0 %v224, 112
        %v250 = vpop.permute.xlu0 %249
        %251 = vrot.lane.b32.xlu0 %v225, 112
        %v252 = vpop.permute.xlu0 %251
        %253 = vrot.lane.b32.xlu0 %v226, 112
        %v254 = vpop.permute.xlu0 %253
        %255 = vrot.lane.b32.xlu0 %v227, 112
        %v256 = vpop.permute.xlu0 %255
        %261 = vmatpush.bf16.msra.mxu0 0
        %262 = vmatpush.bf16.msra.mxu0 0
        %263 = vmatpush.bf16.msra.mxu0 0
        %264 = vmatpush.bf16.msra.mxu0 0
        %265 = vmatpush.bf16.msra.mxu0 %v256
        %266 = vmatpush.bf16.msra.mxu0 %v254
        %267 = vmatpush.bf16.msra.mxu0 %v252
        %268 = vmatpush.bf16.msra.mxu0 %v250
        %269 = vmatmul.bf16.gmra.mxu0 %v234
        %v270 = vpop.f32.mrf.mxu0
        %v271 = vadd.f32 0.0, %v270
        %v272 = vpop.f32.mrf.mxu0
        %273 = vdwg.mxu0
        %274 = vrot.lane.b32.xlu0 %v224, 96
        %v275 = vpop.permute.xlu0 %274
        %276 = vrot.lane.b32.xlu0 %v225, 96
        %v277 = vpop.permute.xlu0 %276
        %278 = vrot.lane.b32.xlu0 %v226, 96
        %v279 = vpop.permute.xlu0 %278
        %280 = vrot.lane.b32.xlu0 %v227, 96
        %v281 = vpop.permute.xlu0 %280
        %286 = vmatpush.bf16.msra.mxu0 0
        %287 = vmatpush.bf16.msra.mxu0 0
        %288 = vmatpush.bf16.msra.mxu0 0
        %289 = vmatpush.bf16.msra.mxu0 0
        %290 = vmatpush.bf16.msra.mxu0 %v281
        %291 = vmatpush.bf16.msra.mxu0 %v279
        %292 = vmatpush.bf16.msra.mxu0 %v277
        %293 = vmatpush.bf16.msra.mxu0 %v275
        %294 = vmatmul.bf16.gmra.mxu0 %v234
        %v295 = vpop.f32.mrf.mxu0
        %v296 = vadd.f32 0.0, %v295
        %v297 = vpop.f32.mrf.mxu0
        %298 = vdwg.mxu0
        %v299 = vpack.c.bf16 %v246, %v246
        %v300 = vpack.c.bf16 %v271, %v271
        %v301 = vpack.c.bf16 %v296, %v296
        %v302 = vld [vmem:[%s196] sm:$0xff]
        %vm303 = vcmask 130048
        %v305 = vsel %vm303, %v299, 0
        %v308 = vsel %vm303, %v300, 0
        %310 = vmatpush.bf16.xpose.msra.mxu0 0
        %311 = vmatpush.bf16.xpose.msra.mxu0 0
        %312 = vmatpush.bf16.xpose.msra.mxu0 0
        %313 = vmatpush.bf16.xpose.msra.mxu0 0
        %314 = vmatpush.bf16.xpose.msra.mxu0 0
        %315 = vmatpush.bf16.xpose.msra.mxu0 0
        %316 = vmatpush.bf16.xpose.msra.mxu0 0
        %317 = vmatpush.bf16.xpose.msra.mxu0 %v308
        %318 = vmatmul.bf16.gmra.mxu0 %v305
        %v319 = vpop.f32.mrf.mxu0
        %v320 = vadd.f32 %v302, %v319
        %v321 = vpop.f32.mrf.mxu0
        %322 = vdwg.mxu0
        %vm323 = vcmask 64512
        %v324 = vsel %vm323, %v320, -inf
        %325 = vmax.xlane.f32.xlu0 %v324
        %v326 = vpop.xlane.xlu0 %325
        %v327 = vsub.f32 %v320, %v326
        %v328 = vmul.f32 %v327, 1.442695
        %v329 = vpow.pop %v328
        %v330 = vpack.c.bf16 %v329, %v329
        %v331 = vsel %vm323, %v329, 0.0
        %332 = vadd.xlane.f32.xlu0 %v331
        %v333 = vpop.xlane.xlu0 %332
        %v334 = vrcp.pop %v333
        %v336 = vsel %vm323, %v330, 0
        %vm338 = vcmask 1043456
        %v340 = vsel %vm338, %v301, 0
        %342 = vmatpush.bf16.msra.mxu0 0
        %343 = vmatpush.bf16.msra.mxu0 0
        %344 = vmatpush.bf16.msra.mxu0 0
        %345 = vmatpush.bf16.msra.mxu0 0
        %346 = vmatpush.bf16.msra.mxu0 0
        %347 = vmatpush.bf16.msra.mxu0 0
        %348 = vmatpush.bf16.msra.mxu0 0
        %349 = vmatpush.bf16.msra.mxu0 %v340
        %350 = vmatmul.bf16.gmra.mxu0 %v336
        %v351 = vpop.f32.mrf.mxu0
        %v352 = vadd.f32 0.0, %v351
        %v353 = vpop.f32.mrf.mxu0
        %354 = vdwg.mxu0
        %v355 = vmul.f32 %v352, %v334
        %356 = vst.msk [vmem:[%s188] sm:$0xff] %vm303, %v355
        %s357 = sand.u32 %s112, 1
        %s358 = scalar_lea.sflag [#allocation3], %s357
        %s359 = sand.u32 %s112, 1
        %s360 = smul.addr %s359, 8
        %s361 = scalar_lea.vmem [#allocation2], %s360
        // Predicated region
        $region33: #{tpu_custom_call.1} parent=31 // pred_check
          %p362 = pneg %p122
        $region34: #{tpu_custom_call.1} parent=31 // pred_check_branch
          %364 = sbr.rel (%p362) target = $region36
        $region35: #{tpu_custom_call.1} parent=31 // pred_region
          %366 = vsyncadd %s358, 0
          %s367 = sadd.s32 %s22, %s21
          %s368 = smul.addr %s367, 8
          %s369 = scalar_lea.hbm %s3, %s368
          %s371 = sshll.u32 %s361, 4
          %s372 = int_to_ptr.vmem [resolvable:$true] %s371
          %s373 = sshll.u32 %s369, 4
          %s374 = int_to_ptr.hbm [resolvable:$true] %s373
          %376 = dma.vmem_to_hbm [thread:$0]  %s372, 128, %s374, %s358
        $region36: #{tpu_custom_call.1} parent=31 // pred_fallthru
          _
      $region32: #{tpu_custom_call.1} parent=5 // pred_fallthru
        _
      %p377 = scmp.le.s32.totalorder 2, %s12
      // Predicated region
      $region37: #{tpu_custom_call.1} parent=5 // pred_check
        %p378 = pneg %p377
      $region38: #{tpu_custom_call.1} parent=5 // pred_check_branch
        %380 = sbr.rel (%p378) target = $region40
      $region39: #{tpu_custom_call.1} parent=5 // pred_region
        %s381 = ssub.s32 %s12, 2
        // Predicated region
        $region41: #{tpu_custom_call.1} parent=39 // pred_check
          %p382 = pneg %p128
        $region42: #{tpu_custom_call.1} parent=39 // pred_check_branch
          %384 = sbr.rel (%p382) target = $region44
        $region43: #{tpu_custom_call.1} parent=39 // pred_region
          %s385 = sand.u32 %s113, 1
          %s386 = scalar_lea.sflag [#allocation3], %s385
          %s387 = sand.u32 %s113, 1
          %s388 = smul.addr %s387, 8
          %s389 = scalar_lea.vmem [#allocation2], %s388
          %391 = dma.done %s386, 128
        $region44: #{tpu_custom_call.1} parent=39 // pred_fallthru
          _
      $region40: #{tpu_custom_call.1} parent=5 // pred_fallthru
        _
    $region6: #{tpu_custom_call.1} parent=1 // loop_footer
      %s16 = sadd.s32 1, %s12
    $region7: #{tpu_custom_call.1} parent=1 // loop_footer_branch
      %11 = sbr.rel target = $region3
    $region8: #{tpu_custom_call.1} parent=1 // loop_exit
      _
    %392 = vsyncpa [#allocation3], 1
    %s393 = scalar_lea.sflag [#allocation3], 1
    %394 = vsyncpa %s393, 1

</llo_original>
